<compile_context>
chip_gen: v7x
topology: tpu7x:2x2x1
jax: 0.10.0
libtpu: 0.0.40
codegen_flags: <defaults>
</compile_context>

<pallas_src>
import functools

import jax
import jax.numpy as jnp
from jax.experimental import pallas as pl
from jax.experimental.pallas import tpu as pltpu

_OUT_PAD = 128  # lane-dense width for the final (padded) output block


def _critic_kernel(num_hidden, s_ref, a_ref, *refs):
    """Fused MLP hot path.

    refs = (w1_state, w1_action, b1,
            w2, b2, ..., wH, bH,
            w_out_padded, b_out_padded, o_ref)
    """
    o_ref = refs[-1]
    params = refs[:-1]

    # First hidden layer with the concat fused in:
    #   h = ReLU(state @ W1[:sd] + action @ W1[sd:] + b1)
    w1_s = params[0][...]
    w1_a = params[1][...]
    b1 = params[2][...]
    h = jnp.maximum(
        jnp.dot(s_ref[...], w1_s, preferred_element_type=jnp.float32)
        + jnp.dot(a_ref[...], w1_a, preferred_element_type=jnp.float32)
        + b1,
        0.0,
    )

    # Remaining hidden layers: Linear + ReLU.
    idx = 3
    for _ in range(1, num_hidden):
        w = params[idx][...]
        b = params[idx + 1][...]
        idx += 2
        h = jnp.maximum(
            jnp.dot(h, w, preferred_element_type=jnp.float32) + b, 0.0
        )

    # Output layer (zero-padded to 128 lanes -> unmasked lane-dense stores).
    w_out = params[idx][...]
    b_out = params[idx + 1][...]
    o_ref[...] = jnp.dot(h, w_out, preferred_element_type=jnp.float32) + b_out


def init_critic_params(key, input_dim, hidden_layers):
    """Deterministic init matching nn.Linear default (uniform +-1/sqrt(fan_in)).

    Returns a flat list [w1, b1, w2, b2, ..., w_out, b_out] with
    weights shaped (in, out) and biases shaped (1, out).
    """
    dims = [input_dim] + list(hidden_layers) + [1]
    params = []
    for in_d, out_d in zip(dims[:-1], dims[1:]):
        key, kw, kb = jax.random.split(key, 3)
        bound = 1.0 / jnp.sqrt(float(in_d))
        w = jax.random.uniform(kw, (in_d, out_d), jnp.float32, -bound, bound)
        b = jax.random.uniform(kb, (1, out_d), jnp.float32, -bound, bound)
        params += [w, b]
    return params


@functools.partial(jax.jit, static_argnames=("hidden_layers", "tile_n"))
def critic_forward(state, action, params, hidden_layers, tile_n=None):
    """Pallas-backed Critic.forward: Q(state, action) -> (N, 1).

    `hidden_layers` must be a tuple (static arg for jit).
    """
    state = state.astype(jnp.float32)
    action = action.astype(jnp.float32)
    n, state_dim = state.shape
    _, action_dim = action.shape
    num_hidden = len(hidden_layers)
    # TODO(synk): num_hidden == 0 (no hidden layers) is not handled; DDPG
    # critics always have at least one hidden layer.
    assert num_hidden >= 1

    # --- choose batch tiling: big tiles, few grid steps -------------------
    n_pad8 = max(8, ((n + 7) // 8) * 8)
    if tile_n is None:
        tile_n = min(n_pad8, 512)          # multiple of 8, as large as useful
    assert tile_n % 8 == 0
    n_pad = ((n + tile_n - 1) // tile_n) * tile_n
    if n_pad != n:
        state = jnp.pad(state, ((0, n_pad - n), (0, 0)))
        action = jnp.pad(action, ((0, n_pad - n), (0, 0)))
    grid = (n_pad // tile_n,)

    # --- split W1 so the concat can be fused into the kernel --------------
    w1, b1 = params[0], params[1]
    w1_state = w1[:state_dim]
    w1_action = w1[state_dim:]

    # --- pad final layer to 128 lanes for lane-dense output stores --------
    w_out, b_out = params[2 * num_hidden], params[2 * num_hidden + 1]
    w_out_p = jnp.pad(w_out, ((0, 0), (0, _OUT_PAD - w_out.shape[1])))
    b_out_p = jnp.pad(b_out, ((0, 0), (0, _OUT_PAD - b_out.shape[1])))

    kernel_params = [w1_state, w1_action, b1]
    for i in range(1, num_hidden):
        kernel_params += [params[2 * i], params[2 * i + 1]]
    kernel_params += [w_out_p, b_out_p]

    kernel = functools.partial(_critic_kernel, num_hidden)

    in_specs = [
        pl.BlockSpec((tile_n, state_dim), lambda i: (i, 0)),
        pl.BlockSpec((tile_n, action_dim), lambda i: (i, 0)),
    ]
    # Weights/biases: full-array blocks, constant index map -> VMEM-resident.
    for p in kernel_params:
        in_specs.append(pl.BlockSpec(p.shape, lambda i: (0, 0)))

    out_spec = pl.BlockSpec((tile_n, _OUT_PAD), lambda i: (i, 0))

    out_padded = pl.pallas_call(
        kernel,
        out_shape=jax.ShapeDtypeStruct((n_pad, _OUT_PAD), jnp.float32),
        grid=grid,
        in_specs=in_specs,
        out_specs=out_spec,
        compiler_params=pltpu.CompilerParams(
            dimension_semantics=("parallel",)
        ),
    )(state, action, *kernel_params)

    # Slice real rows and the single real output column.
    return out_padded[:n, :1]


def critic_reference(state, action, params, num_hidden):
    """Pure-JAX reference for correctness check."""
    h = jnp.concatenate([state, action], axis=1).astype(jnp.float32)
    for i in range(num_hidden):
        h = jnp.maximum(h @ params[2 * i] + params[2 * i + 1], 0.0)
    return h @ params[2 * num_hidden] + params[2 * num_hidden + 1]


if __name__ == "__main__":
    # Small shapes consistent with the module: state_dim=12, action_dim=4,
    # hidden_layers=(32, 32), batch=16.
    state_dim = 12
    action_dim = 4
    hidden_layers = (32, 32)
    batch = 16
    input_dim = state_dim + action_dim

    key = jax.random.PRNGKey(0)
    k_state, k_action, k_params = jax.random.split(key, 3)

    state = jax.random.normal(k_state, (batch, state_dim), jnp.float32)
    action = jax.random.normal(k_action, (batch, action_dim), jnp.float32)
    params = init_critic_params(k_params, input_dim, hidden_layers)

    q = critic_forward(state, action, params, hidden_layers)
    q = jax.block_until_ready(q)

    q_ref = critic_reference(state, action, params, num_hidden=len(hidden_layers))
    assert q.shape == (batch, 1), q.shape
    assert jnp.allclose(q, q_ref, atol=1e-5, rtol=1e-5), (q, q_ref)

    # Also exercise a non-multiple-of-8 batch to verify the padding path.
    q2 = critic_forward(state[:13], action[:13], params, hidden_layers)
    q2 = jax.block_until_ready(q2)
    assert q2.shape == (13, 1)
    assert jnp.allclose(q2, q_ref[:13], atol=1e-5, rtol=1e-5)

    print("KERNEL_OK")
</pallas_src>

<mosaic_0001>
module attributes {stable_mosaic.version = 11 : i64} {
  func.func @_critic_kernel(%arg0: i32, %arg1: memref<16x12xf32, #tpu.memory_space<vmem>>, %arg2: memref<16x4xf32, #tpu.memory_space<vmem>>, %arg3: memref<12x32xf32, #tpu.memory_space<vmem>>, %arg4: memref<4x32xf32, #tpu.memory_space<vmem>>, %arg5: memref<1x32xf32, #tpu.memory_space<vmem>>, %arg6: memref<32x32xf32, #tpu.memory_space<vmem>>, %arg7: memref<1x32xf32, #tpu.memory_space<vmem>>, %arg8: memref<32x128xf32, #tpu.memory_space<vmem>>, %arg9: memref<1x128xf32, #tpu.memory_space<vmem>>, %arg10: memref<16x128xf32, #tpu.memory_space<vmem>>) attributes {dimension_semantics = [#tpu.dimension_semantics<parallel>], iteration_bounds = array<i64: 1>, scalar_prefetch = 0 : i64, scratch_operands = 0 : i64, tpu.core_type = #tpu.core_type<tc>, window_params = [{transform_indices = @transform_0, window_bounds = array<i64: 16, 12>}, {transform_indices = @transform_1, window_bounds = array<i64: 16, 4>}, {pipeline_mode = #tpu.pipeline_mode<synchronous>, transform_indices = @transform_2, window_bounds = array<i64: 12, 32>}, {pipeline_mode = #tpu.pipeline_mode<synchronous>, transform_indices = @transform_3, window_bounds = array<i64: 4, 32>}, {pipeline_mode = #tpu.pipeline_mode<synchronous>, transform_indices = @transform_4, window_bounds = array<i64: 1, 32>}, {pipeline_mode = #tpu.pipeline_mode<synchronous>, transform_indices = @transform_5, window_bounds = array<i64: 32, 32>}, {pipeline_mode = #tpu.pipeline_mode<synchronous>, transform_indices = @transform_6, window_bounds = array<i64: 1, 32>}, {pipeline_mode = #tpu.pipeline_mode<synchronous>, transform_indices = @transform_7, window_bounds = array<i64: 32, 128>}, {pipeline_mode = #tpu.pipeline_mode<synchronous>, transform_indices = @transform_8, window_bounds = array<i64: 1, 128>}, {transform_indices = @transform_9, window_bounds = array<i64: 16, 128>}]} {
    %c0 = arith.constant 0 : index
    %c0_0 = arith.constant 0 : index
    %0 = vector.load %arg3[%c0, %c0_0] : memref<12x32xf32, #tpu.memory_space<vmem>>, vector<12x32xf32>
    %c0_1 = arith.constant 0 : index
    %c0_2 = arith.constant 0 : index
    %1 = vector.load %arg4[%c0_1, %c0_2] : memref<4x32xf32, #tpu.memory_space<vmem>>, vector<4x32xf32>
    %c0_3 = arith.constant 0 : index
    %c0_4 = arith.constant 0 : index
    %2 = vector.load %arg5[%c0_3, %c0_4] : memref<1x32xf32, #tpu.memory_space<vmem>>, vector<1x32xf32>
    %c0_5 = arith.constant 0 : index
    %c0_6 = arith.constant 0 : index
    %3 = vector.load %arg1[%c0_5, %c0_6] : memref<16x12xf32, #tpu.memory_space<vmem>>, vector<16x12xf32>
    %cst = arith.constant dense<0.000000e+00> : vector<16x32xf32>
    %4 = tpu.matmul %3, %0, %cst {dimension_numbers = #tpu.dot_dimension_numbers<[1], [0], [0], [1], [0, 0, 1, 1], [], []>} : vector<16x12xf32>, vector<12x32xf32>, vector<16x32xf32> -> vector<16x32xf32>
    %c0_7 = arith.constant 0 : index
    %c0_8 = arith.constant 0 : index
    %5 = vector.load %arg2[%c0_7, %c0_8] : memref<16x4xf32, #tpu.memory_space<vmem>>, vector<16x4xf32>
    %cst_9 = arith.constant dense<0.000000e+00> : vector<16x32xf32>
    %6 = tpu.matmul %5, %1, %cst_9 {dimension_numbers = #tpu.dot_dimension_numbers<[1], [0], [0], [1], [0, 0, 1, 1], [], []>} : vector<16x4xf32>, vector<4x32xf32>, vector<16x32xf32> -> vector<16x32xf32>
    %7 = arith.addf %4, %6 : vector<16x32xf32>
    %8 = vector.broadcast %2 : vector<1x32xf32> to vector<16x32xf32>
    %9 = arith.addf %7, %8 : vector<16x32xf32>
    %cst_10 = arith.constant 0.000000e+00 : f32
    %10 = vector.broadcast %cst_10 : f32 to vector<16x32xf32>
    %11 = arith.maximumf %9, %10 : vector<16x32xf32>
    %c0_11 = arith.constant 0 : index
    %c0_12 = arith.constant 0 : index
    %12 = vector.load %arg6[%c0_11, %c0_12] : memref<32x32xf32, #tpu.memory_space<vmem>>, vector<32x32xf32>
    %c0_13 = arith.constant 0 : index
    %c0_14 = arith.constant 0 : index
    %13 = vector.load %arg7[%c0_13, %c0_14] : memref<1x32xf32, #tpu.memory_space<vmem>>, vector<1x32xf32>
    %cst_15 = arith.constant dense<0.000000e+00> : vector<16x32xf32>
    %14 = tpu.matmul %11, %12, %cst_15 {dimension_numbers = #tpu.dot_dimension_numbers<[1], [0], [0], [1], [0, 0, 1, 1], [], []>} : vector<16x32xf32>, vector<32x32xf32>, vector<16x32xf32> -> vector<16x32xf32>
    %15 = vector.broadcast %13 : vector<1x32xf32> to vector<16x32xf32>
    %16 = arith.addf %14, %15 : vector<16x32xf32>
    %cst_16 = arith.constant 0.000000e+00 : f32
    %17 = vector.broadcast %cst_16 : f32 to vector<16x32xf32>
    %18 = arith.maximumf %16, %17 : vector<16x32xf32>
    %c0_17 = arith.constant 0 : index
    %c0_18 = arith.constant 0 : index
    %19 = vector.load %arg8[%c0_17, %c0_18] : memref<32x128xf32, #tpu.memory_space<vmem>>, vector<32x128xf32>
    %c0_19 = arith.constant 0 : index
    %c0_20 = arith.constant 0 : index
    %20 = vector.load %arg9[%c0_19, %c0_20] : memref<1x128xf32, #tpu.memory_space<vmem>>, vector<1x128xf32>
    %cst_21 = arith.constant dense<0.000000e+00> : vector<16x128xf32>
    %21 = tpu.matmul %18, %19, %cst_21 {dimension_numbers = #tpu.dot_dimension_numbers<[1], [0], [0], [1], [0, 0, 1, 1], [], []>} : vector<16x32xf32>, vector<32x128xf32>, vector<16x128xf32> -> vector<16x128xf32>
    %22 = vector.broadcast %20 : vector<1x128xf32> to vector<16x128xf32>
    %23 = arith.addf %21, %22 : vector<16x128xf32>
    %c0_22 = arith.constant 0 : index
    %c0_23 = arith.constant 0 : index
    %24 = vector.load %arg10[%c0_22, %c0_23] : memref<16x128xf32, #tpu.memory_space<vmem>>, vector<16x128xf32>
    tpu.vector_store %arg10[%c0_22, %c0_23], %23 {strides = array<i32>} : memref<16x128xf32, #tpu.memory_space<vmem>>, vector<16x128xf32>,
    return
  }
  func.func @transform_0(%arg0: i32) -> (i32, i32) {
    %c0_i32 = arith.constant 0 : i32
    %c0_i32_0 = arith.constant 0 : i32
    return %arg0, %c0_i32 : i32, i32
  }
  func.func @transform_1(%arg0: i32) -> (i32, i32) {
    %c0_i32 = arith.constant 0 : i32
    %c0_i32_0 = arith.constant 0 : i32
    return %arg0, %c0_i32 : i32, i32
  }
  func.func @transform_2(%arg0: i32) -> (i32, i32) {
    %c0_i32 = arith.constant 0 : i32
    %c0_i32_0 = arith.constant 0 : i32
    %c0_i32_1 = arith.constant 0 : i32
    return %c0_i32, %c0_i32_0 : i32, i32
  }
  func.func @transform_3(%arg0: i32) -> (i32, i32) {
    %c0_i32 = arith.constant 0 : i32
    %c0_i32_0 = arith.constant 0 : i32
    %c0_i32_1 = arith.constant 0 : i32
    return %c0_i32, %c0_i32_0 : i32, i32
  }
  func.func @transform_4(%arg0: i32) -> (i32, i32) {
    %c0_i32 = arith.constant 0 : i32
    %c0_i32_0 = arith.constant 0 : i32
    %c0_i32_1 = arith.constant 0 : i32
    return %c0_i32, %c0_i32_0 : i32, i32
  }
  func.func @transform_5(%arg0: i32) -> (i32, i32) {
    %c0_i32 = arith.constant 0 : i32
    %c0_i32_0 = arith.constant 0 : i32
    %c0_i32_1 = arith.constant 0 : i32
    return %c0_i32, %c0_i32_0 : i32, i32
  }
  func.func @transform_6(%arg0: i32) -> (i32, i32) {
    %c0_i32 = arith.constant 0 : i32
    %c0_i32_0 = arith.constant 0 : i32
    %c0_i32_1 = arith.constant 0 : i32
    return %c0_i32, %c0_i32_0 : i32, i32
  }
  func.func @transform_7(%arg0: i32) -> (i32, i32) {
    %c0_i32 = arith.constant 0 : i32
    %c0_i32_0 = arith.constant 0 : i32
    %c0_i32_1 = arith.constant 0 : i32
    return %c0_i32, %c0_i32_0 : i32, i32
  }
  func.func @transform_8(%arg0: i32) -> (i32, i32) {
    %c0_i32 = arith.constant 0 : i32
    %c0_i32_0 = arith.constant 0 : i32
    %c0_i32_1 = arith.constant 0 : i32
    return %c0_i32, %c0_i32_0 : i32, i32
  }
  func.func @transform_9(%arg0: i32) -> (i32, i32) {
    %c0_i32 = arith.constant 0 : i32
    %c0_i32_0 = arith.constant 0 : i32
    return %arg0, %c0_i32 : i32, i32
  }
}

</mosaic_0001>

<llo_original>
// kernel: critic_forward.1
$region0: #{critic_forward.1}
  #allocation0 [shape = 'u32[]', space=smem, size = 0x4, offset = 0x4, fixed_abs, tag = 'smem constant byte address 0x4 - core index']
  #allocation1 [shape = 'u32[144,128]{1,0:T(1,128)}', space=vmem, size = 0x12000, scoped, tag = 'internal scratch']
  %s0 = inlined_call_operand.vmem [shape: f32[16,12], index: 0, kind: input, shape index: {}]
  %s1 = inlined_call_operand.vmem [shape: f32[16,4], index: 1, kind: input, shape index: {}]
  %s2 = inlined_call_operand.vmem [shape: f32[12,32], index: 2, kind: input, shape index: {}]
  %s3 = inlined_call_operand.vmem [shape: f32[4,32], index: 3, kind: input, shape index: {}]
  %s4 = inlined_call_operand.vmem [shape: f32[1,32], index: 4, kind: input, shape index: {}]
  %s5 = inlined_call_operand.vmem [shape: f32[32,32], index: 5, kind: input, shape index: {}]
  %s6 = inlined_call_operand.vmem [shape: f32[1,32], index: 6, kind: input, shape index: {}]
  %s7 = inlined_call_operand.vmem [shape: f32[32,128], index: 7, kind: input, shape index: {}]
  %s8 = inlined_call_operand.vmem [shape: f32[1,128], index: 8, kind: input, shape index: {}]
  %s9 = inlined_call_operand.vmem [shape: f32[16,128], index: 9, kind: output, shape index: {}]
  %s10 = sld [smem:[#allocation0]]
  $region46: #{critic_forward.1} parent=0
    _
  %s12 = ssub.s32 1, %s10
  %s13 = scalar_select 0, %s12, %s10
  // Predicated region
  $region2: #{critic_forward.1} parent=0 // pred_check
    _
  $region3: #{critic_forward.1} parent=0 // pred_check_branch
    %15 = sbr.rel (0) target = $region5
  $region4: #{critic_forward.1} parent=0 // pred_region
    _
  $region5: #{critic_forward.1} parent=0 // pred_fallthru
    _
  // Predicated region
  $region6: #{critic_forward.1} parent=0 // pred_check
    _
  $region7: #{critic_forward.1} parent=0 // pred_check_branch
    %17 = sbr.rel (0) target = $region9
  $region8: #{critic_forward.1} parent=0 // pred_region
    _
  $region9: #{critic_forward.1} parent=0 // pred_fallthru
    _
  // Predicated region
  $region10: #{critic_forward.1} parent=0 // pred_check
    _
  $region11: #{critic_forward.1} parent=0 // pred_check_branch
    %19 = sbr.rel (0) target = $region13
  $region12: #{critic_forward.1} parent=0 // pred_region
    _
  $region13: #{critic_forward.1} parent=0 // pred_fallthru
    _
  // Predicated region
  $region14: #{critic_forward.1} parent=0 // pred_check
    _
  $region15: #{critic_forward.1} parent=0 // pred_check_branch
    %21 = sbr.rel (0) target = $region17
  $region16: #{critic_forward.1} parent=0 // pred_region
    _
  $region17: #{critic_forward.1} parent=0 // pred_fallthru
    _
  // Predicated region
  $region18: #{critic_forward.1} parent=0 // pred_check
    _
  $region19: #{critic_forward.1} parent=0 // pred_check_branch
    %23 = sbr.rel (0) target = $region21
  $region20: #{critic_forward.1} parent=0 // pred_region
    _
  $region21: #{critic_forward.1} parent=0 // pred_fallthru
    _
  // Predicated region
  $region22: #{critic_forward.1} parent=0 // pred_check
    _
  $region23: #{critic_forward.1} parent=0 // pred_check_branch
    %25 = sbr.rel (0) target = $region25
  $region24: #{critic_forward.1} parent=0 // pred_region
    _
  $region25: #{critic_forward.1} parent=0 // pred_fallthru
    _
  // Predicated region
  $region26: #{critic_forward.1} parent=0 // pred_check
    _
  $region27: #{critic_forward.1} parent=0 // pred_check_branch
    %27 = sbr.rel (0) target = $region29
  $region28: #{critic_forward.1} parent=0 // pred_region
    _
  $region29: #{critic_forward.1} parent=0 // pred_fallthru
    _
  // Predicated region
  $region30: #{critic_forward.1} parent=0 // pred_check
    _
  $region31: #{critic_forward.1} parent=0 // pred_check_branch
    %29 = sbr.rel (0) target = $region33
  $region32: #{critic_forward.1} parent=0 // pred_region
    _
  $region33: #{critic_forward.1} parent=0 // pred_fallthru
    _
  // Predicated region
  $region34: #{critic_forward.1} parent=0 // pred_check
    _
  $region35: #{critic_forward.1} parent=0 // pred_check_branch
    %31 = sbr.rel (0) target = $region37
  $region36: #{critic_forward.1} parent=0 // pred_region
    _
  $region37: #{critic_forward.1} parent=0 // pred_fallthru
    _
  %v32 = vld [vmem:[%s2] sm:$0xff]
  %v33 = vld [vmem:[%s2 + $0x8] sm:$0xf]
  %v34 = vld [vmem:[%s3] sm:$0xf]
  %v35 = vld [vmem:[%s4] sm:$0x1]
  %v36 = vld [vmem:[%s0] sm:$0xff]
  %v37 = vld [vmem:[%s0 + $0x8] sm:$0xff]
  %v38 = vld [vmem:[%s1] sm:$0xff]
  %v39 = vld [vmem:[%s1 + $0x8] sm:$0xff]
  %vm40 = vcmask 31744
  %v42 = vsel %vm40, %v38, 0
  %v45 = vsel %vm40, %v39, 0
  %vm47 = vcmask 1043456
  %v49 = vsel %vm47, %v34, 0
  %51 = vmatprep.subr.mxu0 0.0
  %52 = vmatpush1.msra.mxu0 %v49
  %53 = vmatprep.subr.mxu0 0.0
  %54 = vmatpush1.msra.mxu0 0.0
  %55 = vmatprep.subr.mxu0 0.0
  %56 = vmatpush1.msra.mxu0 0.0
  %57 = vmatprep.subr.mxu0 0.0
  %58 = vmatpush1.msra.mxu0 0.0
  %59 = vmatprep.subr.mxu0 0.0
  %60 = vmatpush1.msra.mxu0 0.0
  %61 = vmatprep.subr.mxu0 0.0
  %62 = vmatpush1.msra.mxu0 0.0
  %63 = vmatprep.subr.mxu0 0.0
  %64 = vmatpush1.msra.mxu0 0.0
  %65 = vmatprep.subr.mxu0 0.0
  %66 = vmatpush1.msra.mxu0 0.0
  %67 = vmatprep.subr.mxu0 0.0
  %68 = vmatpush1.msra.mxu0 0.0
  %69 = vmatprep.subr.mxu0 0.0
  %70 = vmatpush1.msra.mxu0 0.0
  %71 = vmatprep.subr.mxu0 0.0
  %72 = vmatpush1.msra.mxu0 0.0
  %73 = vmatprep.subr.mxu0 0.0
  %74 = vmatpush1.msra.mxu0 0.0
  %75 = vmatprep.subr.mxu0 0.0
  %76 = vmatpush1.msra.mxu0 0.0
  %77 = vmatprep.subr.mxu0 0.0
  %78 = vmatpush1.msra.mxu0 0.0
  %79 = vmatprep.subr.mxu0 0.0
  %80 = vmatpush1.msra.mxu0 0.0
  %81 = vmatprep.subr.mxu0 0.0
  %82 = vmatpush1.msra.mxu0 0.0
  %83 = vmatprep.subr.mxu0 0.0
  %84 = vmatpush1.msra.mxu0 0.0
  %85 = vmatprep.subr.mxu0 0.0
  %86 = vmatpush1.msra.mxu0 0.0
  %87 = vmatprep.subr.mxu0 0.0
  %88 = vmatpush1.msra.mxu0 0.0
  %89 = vmatprep.subr.mxu0 0.0
  %90 = vmatpush1.msra.mxu0 0.0
  %91 = vmatprep.subr.mxu0 0.0
  %92 = vmatpush1.msra.mxu0 0.0
  %93 = vmatprep.subr.mxu0 0.0
  %94 = vmatpush1.msra.mxu0 0.0
  %95 = vmatprep.subr.mxu0 0.0
  %96 = vmatpush1.msra.mxu0 0.0
  %97 = vmatprep.subr.mxu0 0.0
  %98 = vmatpush1.msra.mxu0 0.0
  %99 = vmatprep.subr.mxu0 0.0
  %100 = vmatpush1.msra.mxu0 0.0
  %101 = vmatprep.subr.mxu0 0.0
  %102 = vmatpush1.msra.mxu0 0.0
  %103 = vmatprep.subr.mxu0 0.0
  %104 = vmatpush1.msra.mxu0 0.0
  %105 = vmatprep.subr.mxu0 0.0
  %106 = vmatpush1.msra.mxu0 0.0
  %107 = vmatprep.subr.mxu0 0.0
  %108 = vmatpush1.msra.mxu0 0.0
  %109 = vmatprep.subr.mxu0 0.0
  %110 = vmatpush1.msra.mxu0 0.0
  %111 = vmatprep.subr.mxu0 0.0
  %112 = vmatpush1.msra.mxu0 0.0
  %113 = vmatprep.subr.mxu0 0.0
  %114 = vmatpush1.msra.mxu0 0.0
  %115 = vmatprep.mubr.f32.mxu0 0.0
  %116 = vmatmul.mubr.f32.gmra.mrb[0].mxu0 %v42
  %v117 = vpop.f32.mrb[0].mxu0
  %v118 = vadd.f32 0.0, %v117
  %v119 = vpop.f32.mrb[0].mxu0
  %120 = vmatprep.mubr.f32.mxu0 0.0
  %121 = vmatmul.mubr.f32.gmra.mrb[0].mxu0 %v45
  %v122 = vpop.f32.mrb[0].mxu0
  %v123 = vadd.f32 0.0, %v122
  %v124 = vpop.f32.mrb[0].mxu0
  %125 = vdwg.mxu0
  %vm126 = vcmask 97280
  %v128 = vsel %vm126, %v36, 0
  %v131 = vsel %vm126, %v37, 0
  %v134 = vsel %vm47, %v33, 0
  %136 = vmatprep.subr.mxu0 0.0
  %137 = vmatpush1.msra.mxu0 %v32
  %138 = vmatprep.subr.mxu0 0.0
  %139 = vmatpush1.msra.mxu0 %v134
  %140 = vmatprep.subr.mxu0 0.0
  %141 = vmatpush1.msra.mxu0 0.0
  %142 = vmatprep.subr.mxu0 0.0
  %143 = vmatpush1.msra.mxu0 0.0
  %144 = vmatprep.subr.mxu0 0.0
  %145 = vmatpush1.msra.mxu0 0.0
  %146 = vmatprep.subr.mxu0 0.0
  %147 = vmatpush1.msra.mxu0 0.0
  %148 = vmatprep.subr.mxu0 0.0
  %149 = vmatpush1.msra.mxu0 0.0
  %150 = vmatprep.subr.mxu0 0.0
  %151 = vmatpush1.msra.mxu0 0.0
  %152 = vmatprep.subr.mxu0 0.0
  %153 = vmatpush1.msra.mxu0 0.0
  %154 = vmatprep.subr.mxu0 0.0
  %155 = vmatpush1.msra.mxu0 0.0
  %156 = vmatprep.subr.mxu0 0.0
  %157 = vmatpush1.msra.mxu0 0.0
  %158 = vmatprep.subr.mxu0 0.0
  %159 = vmatpush1.msra.mxu0 0.0
  %160 = vmatprep.subr.mxu0 0.0
  %161 = vmatpush1.msra.mxu0 0.0
  %162 = vmatprep.subr.mxu0 0.0
  %163 = vmatpush1.msra.mxu0 0.0
  %164 = vmatprep.subr.mxu0 0.0
  %165 = vmatpush1.msra.mxu0 0.0
  %166 = vmatprep.subr.mxu0 0.0
  %167 = vmatpush1.msra.mxu0 0.0
  %168 = vmatprep.subr.mxu0 0.0
  %169 = vmatpush1.msra.mxu0 0.0
  %170 = vmatprep.subr.mxu0 0.0
  %171 = vmatpush1.msra.mxu0 0.0
  %172 = vmatprep.subr.mxu0 0.0
  %173 = vmatpush1.msra.mxu0 0.0
  %174 = vmatprep.subr.mxu0 0.0
  %175 = vmatpush1.msra.mxu0 0.0
  %176 = vmatprep.subr.mxu0 0.0
  %177 = vmatpush1.msra.mxu0 0.0
  %178 = vmatprep.subr.mxu0 0.0
  %179 = vmatpush1.msra.mxu0 0.0
  %180 = vmatprep.subr.mxu0 0.0
  %181 = vmatpush1.msra.mxu0 0.0
  %182 = vmatprep.subr.mxu0 0.0
  %183 = vmatpush1.msra.mxu0 0.0
  %184 = vmatprep.subr.mxu0 0.0
  %185 = vmatpush1.msra.mxu0 0.0
  %186 = vmatprep.subr.mxu0 0.0
  %187 = vmatpush1.msra.mxu0 0.0
  %188 = vmatprep.subr.mxu0 0.0
  %189 = vmatpush1.msra.mxu0 0.0
  %190 = vmatprep.subr.mxu0 0.0
  %191 = vmatpush1.msra.mxu0 0.0
  %192 = vmatprep.subr.mxu0 0.0
  %193 = vmatpush1.msra.mxu0 0.0
  %194 = vmatprep.subr.mxu0 0.0
  %195 = vmatpush1.msra.mxu0 0.0
  %196 = vmatprep.subr.mxu0 0.0
  %197 = vmatpush1.msra.mxu0 0.0
  %198 = vmatprep.subr.mxu0 0.0
  %199 = vmatpush1.msra.mxu0 0.0
  %200 = vmatprep.mubr.f32.mxu0 0.0
  %201 = vmatmul.mubr.f32.gmra.mrb[0].mxu0 %v128
  %v202 = vpop.f32.mrb[0].mxu0
  %v203 = vadd.f32 %v118, %v202
  %v204 = vpop.f32.mrb[0].mxu0
  %205 = vmatprep.mubr.f32.mxu0 0.0
  %206 = vmatmul.mubr.f32.gmra.mrb[0].mxu0 %v131
  %v207 = vpop.f32.mrb[0].mxu0
  %v208 = vadd.f32 %v123, %v207
  %v209 = vpop.f32.mrb[0].mxu0
  %210 = vdwg.mxu0
  %v212 = vlaneseq
  %v213 = vshrl.u32 %v212, 7
  %v214 = vsub.s32 0, %v213
  %v215 = vrot.slane %v35, %v214
  %v217 = vadd.f32 %v203, %v215
  %v218 = vadd.f32 %v208, %v215
  %v219 = vmax.f32 %v217, 0.0
  %v220 = vmax.f32 %v218, 0.0
  %v221 = vld [vmem:[%s5] sm:$0xff]
  %v222 = vld [vmem:[%s5 + $0x8] sm:$0xff]
  %v223 = vld [vmem:[%s5 + $0x10] sm:$0xff]
  %v224 = vld [vmem:[%s5 + $0x18] sm:$0xff]
  %v225 = vld [vmem:[%s6] sm:$0x1]
  %v227 = vlaneseq
  %v228 = vshrl.u32 %v227, 7
  %v229 = vsub.s32 0, %v228
  %v230 = vrot.slane %v225, %v229
  %vm232 = vcmask 261120
  %v234 = vsel %vm232, %v219, 0
  %v237 = vsel %vm232, %v220, 0
  %239 = vmatprep.subr.mxu0 0.0
  %240 = vmatpush1.msra.mxu0 %v221
  %241 = vmatprep.subr.mxu0 0.0
  %242 = vmatpush1.msra.mxu0 %v222
  %243 = vmatprep.subr.mxu0 0.0
  %244 = vmatpush1.msra.mxu0 %v223
  %245 = vmatprep.subr.mxu0 0.0
  %246 = vmatpush1.msra.mxu0 %v224
  %247 = vmatprep.subr.mxu0 0.0
  %248 = vmatpush1.msra.mxu0 0.0
  %249 = vmatprep.subr.mxu0 0.0
  %250 = vmatpush1.msra.mxu0 0.0
  %251 = vmatprep.subr.mxu0 0.0
  %252 = vmatpush1.msra.mxu0 0.0
  %253 = vmatprep.subr.mxu0 0.0
  %254 = vmatpush1.msra.mxu0 0.0
  %255 = vmatprep.subr.mxu0 0.0
  %256 = vmatpush1.msra.mxu0 0.0
  %257 = vmatprep.subr.mxu0 0.0
  %258 = vmatpush1.msra.mxu0 0.0
  %259 = vmatprep.subr.mxu0 0.0
  %260 = vmatpush1.msra.mxu0 0.0
  %261 = vmatprep.subr.mxu0 0.0
  %262 = vmatpush1.msra.mxu0 0.0
  %263 = vmatprep.subr.mxu0 0.0
  %264 = vmatpush1.msra.mxu0 0.0
  %265 = vmatprep.subr.mxu0 0.0
  %266 = vmatpush1.msra.mxu0 0.0
  %267 = vmatprep.subr.mxu0 0.0
  %268 = vmatpush1.msra.mxu0 0.0
  %269 = vmatprep.subr.mxu0 0.0
  %270 = vmatpush1.msra.mxu0 0.0
  %271 = vmatprep.subr.mxu0 0.0
  %272 = vmatpush1.msra.mxu0 0.0
  %273 = vmatprep.subr.mxu0 0.0
  %274 = vmatpush1.msra.mxu0 0.0
  %275 = vmatprep.subr.mxu0 0.0
  %276 = vmatpush1.msra.mxu0 0.0
  %277 = vmatprep.subr.mxu0 0.0
  %278 = vmatpush1.msra.mxu0 0.0
  %279 = vmatprep.subr.mxu0 0.0
  %280 = vmatpush1.msra.mxu0 0.0
  %281 = vmatprep.subr.mxu0 0.0
  %282 = vmatpush1.msra.mxu0 0.0
  %283 = vmatprep.subr.mxu0 0.0
  %284 = vmatpush1.msra.mxu0 0.0
  %285 = vmatprep.subr.mxu0 0.0
  %286 = vmatpush1.msra.mxu0 0.0
  %287 = vmatprep.subr.mxu0 0.0
  %288 = vmatpush1.msra.mxu0 0.0
  %289 = vmatprep.subr.mxu0 0.0
  %290 = vmatpush1.msra.mxu0 0.0
  %291 = vmatprep.subr.mxu0 0.0
  %292 = vmatpush1.msra.mxu0 0.0
  %293 = vmatprep.subr.mxu0 0.0
  %294 = vmatpush1.msra.mxu0 0.0
  %295 = vmatprep.subr.mxu0 0.0
  %296 = vmatpush1.msra.mxu0 0.0
  %297 = vmatprep.subr.mxu0 0.0
  %298 = vmatpush1.msra.mxu0 0.0
  %299 = vmatprep.subr.mxu0 0.0
  %300 = vmatpush1.msra.mxu0 0.0
  %301 = vmatprep.subr.mxu0 0.0
  %302 = vmatpush1.msra.mxu0 0.0
  %303 = vmatprep.mubr.f32.mxu0 0.0
  %304 = vmatmul.mubr.f32.gmra.mrb[0].mxu0 %v234
  %v305 = vpop.f32.mrb[0].mxu0
  %v306 = vadd.f32 %v230, %v305
  %v307 = vpop.f32.mrb[0].mxu0
  %308 = vmatprep.mubr.f32.mxu0 0.0
  %309 = vmatmul.mubr.f32.gmra.mrb[0].mxu0 %v237
  %v310 = vpop.f32.mrb[0].mxu0
  %v311 = vadd.f32 %v230, %v310
  %v312 = vpop.f32.mrb[0].mxu0
  %313 = vdwg.mxu0
  %v314 = vmax.f32 %v306, 0.0
  %v315 = vmax.f32 %v311, 0.0
  %v316 = vld [vmem:[%s7] sm:$0xff]
  %v317 = vld [vmem:[%s7 + $0x8] sm:$0xff]
  %v318 = vld [vmem:[%s7 + $0x10] sm:$0xff]
  %v319 = vld [vmem:[%s7 + $0x18] sm:$0xff]
  %v320 = vld [vmem:[%s8] sm:$0x1]
  %v322 = vlaneseq
  %v323 = vshrl.u32 %v322, 7
  %v324 = vsub.s32 0, %v323
  %v325 = vrot.slane %v320, %v324
  %v328 = vsel %vm232, %v314, 0
  %v331 = vsel %vm232, %v315, 0
  %333 = vmatprep.subr.mxu0 0.0
  %334 = vmatpush1.msra.mxu0 %v316
  %335 = vmatprep.subr.mxu0 0.0
  %336 = vmatpush1.msra.mxu0 %v317
  %337 = vmatprep.subr.mxu0 0.0
  %338 = vmatpush1.msra.mxu0 %v318
  %339 = vmatprep.subr.mxu0 0.0
  %340 = vmatpush1.msra.mxu0 %v319
  %341 = vmatprep.subr.mxu0 0.0
  %342 = vmatpush1.msra.mxu0 0.0
  %343 = vmatprep.subr.mxu0 0.0
  %344 = vmatpush1.msra.mxu0 0.0
  %345 = vmatprep.subr.mxu0 0.0
  %346 = vmatpush1.msra.mxu0 0.0
  %347 = vmatprep.subr.mxu0 0.0
  %348 = vmatpush1.msra.mxu0 0.0
  %349 = vmatprep.subr.mxu0 0.0
  %350 = vmatpush1.msra.mxu0 0.0
  %351 = vmatprep.subr.mxu0 0.0
  %352 = vmatpush1.msra.mxu0 0.0
  %353 = vmatprep.subr.mxu0 0.0
  %354 = vmatpush1.msra.mxu0 0.0
  %355 = vmatprep.subr.mxu0 0.0
  %356 = vmatpush1.msra.mxu0 0.0
  %357 = vmatprep.subr.mxu0 0.0
  %358 = vmatpush1.msra.mxu0 0.0
  %359 = vmatprep.subr.mxu0 0.0
  %360 = vmatpush1.msra.mxu0 0.0
  %361 = vmatprep.subr.mxu0 0.0
  %362 = vmatpush1.msra.mxu0 0.0
  %363 = vmatprep.subr.mxu0 0.0
  %364 = vmatpush1.msra.mxu0 0.0
  %365 = vmatprep.subr.mxu0 0.0
  %366 = vmatpush1.msra.mxu0 0.0
  %367 = vmatprep.subr.mxu0 0.0
  %368 = vmatpush1.msra.mxu0 0.0
  %369 = vmatprep.subr.mxu0 0.0
  %370 = vmatpush1.msra.mxu0 0.0
  %371 = vmatprep.subr.mxu0 0.0
  %372 = vmatpush1.msra.mxu0 0.0
  %373 = vmatprep.subr.mxu0 0.0
  %374 = vmatpush1.msra.mxu0 0.0
  %375 = vmatprep.subr.mxu0 0.0
  %376 = vmatpush1.msra.mxu0 0.0
  %377 = vmatprep.subr.mxu0 0.0
  %378 = vmatpush1.msra.mxu0 0.0
  %379 = vmatprep.subr.mxu0 0.0
  %380 = vmatpush1.msra.mxu0 0.0
  %381 = vmatprep.subr.mxu0 0.0
  %382 = vmatpush1.msra.mxu0 0.0
  %383 = vmatprep.subr.mxu0 0.0
  %384 = vmatpush1.msra.mxu0 0.0
  %385 = vmatprep.subr.mxu0 0.0
  %386 = vmatpush1.msra.mxu0 0.0
  %387 = vmatprep.subr.mxu0 0.0
  %388 = vmatpush1.msra.mxu0 0.0
  %389 = vmatprep.subr.mxu0 0.0
  %390 = vmatpush1.msra.mxu0 0.0
  %391 = vmatprep.subr.mxu0 0.0
  %392 = vmatpush1.msra.mxu0 0.0
  %393 = vmatprep.subr.mxu0 0.0
  %394 = vmatpush1.msra.mxu0 0.0
  %395 = vmatprep.subr.mxu0 0.0
  %396 = vmatpush1.msra.mxu0 0.0
  %397 = vmatprep.mubr.f32.mxu0 0.0
  %398 = vmatmul.mubr.f32.gmra.mrb[0].mxu0 %v328
  %v399 = vpop.f32.mrb[0].mxu0
  %v400 = vadd.f32 %v325, %v399
  %v401 = vpop.f32.mrb[0].mxu0
  %402 = vmatprep.mubr.f32.mxu0 0.0
  %403 = vmatmul.mubr.f32.gmra.mrb[0].mxu0 %v331
  %v404 = vpop.f32.mrb[0].mxu0
  %v405 = vadd.f32 %v325, %v404
  %v406 = vpop.f32.mrb[0].mxu0
  %407 = vdwg.mxu0
  %408 = vst [vmem:[%s9] sm:$0xff] %v400
  %409 = vst [vmem:[%s9 + $0x8] sm:$0xff] %v405
  // Predicated region
  $region38: #{critic_forward.1} parent=0 // pred_check
    _
  $region39: #{critic_forward.1} parent=0 // pred_check_branch
    %411 = sbr.rel (0) target = $region41
  $region40: #{critic_forward.1} parent=0 // pred_region
    _
  $region41: #{critic_forward.1} parent=0 // pred_fallthru
    _
  // Predicated region
  $region42: #{critic_forward.1} parent=0 // pred_check
    _
  $region43: #{critic_forward.1} parent=0 // pred_check_branch
    %413 = sbr.rel (0) target = $region45
  $region44: #{critic_forward.1} parent=0 // pred_region
    _
  $region45: #{critic_forward.1} parent=0 // pred_fallthru
    _

</llo_original>
